<compile_context>
chip_gen: v7x
topology: tpu7x:2x2x1
jax: 0.10.0
libtpu: 0.0.40
codegen_flags: <defaults>
</compile_context>

<pallas_src>
import math
from functools import partial

import jax
import jax.numpy as jnp
import numpy as np
from jax.experimental import pallas as pl
from jax.experimental.pallas import tpu as pltpu


# ---------------------------------------------------------------------------
# Hardware-aware sizing
# ---------------------------------------------------------------------------
def _vmem_capacity_bytes():
    try:
        info = pltpu.get_tpu_info()
        cap = getattr(info, "vmem_capacity_bytes", None)
        if cap:
            return int(cap)
    except Exception:
        pass
    return 64 * 1024 * 1024  # conservative default (safe on every generation)


def _vmem_budget_bytes():
    # Working-set target; leaves headroom for Mosaic internal scratch.
    return max(16 * 1024 * 1024, int(0.45 * _vmem_capacity_bytes()))


def _vmem_limit_bytes():
    return int(min(0.75 * _vmem_capacity_bytes(), 96 * 1024 * 1024))


def _pick_lane_tile(B, L, E, N, dx, do, budget):
    """Lane tile for the two-pass (matmul-only) path: multiple of 128, prefers
    an exact divisor of L (no masked tail), sized from the VMEM budget."""
    fixed = 2 * N * E * 2 + 2 * N * 4              # resident weight (bf16) + bias
    per_lane = 2 * E * dx + 2 * N * do + 4 * N     # x, out (double-buffered) + f32 acc
    t_max = max(128, (budget - fixed) // max(per_lane, 1))
    if L <= t_max and (B >= 2 or L <= 128):
        return L                                    # full extent: allowed, no tail
    if B < 2:                                       # keep >= 2 parallel steps (v7x: 2 TCs)
        t_max = min(t_max, max(128, -(-L // 2)))
    t_max = max(128, min((t_max // 128) * 128, 2048))
    if L <= t_max:
        return L
    for t in range(t_max, 127, -128):               # prefer a divisor of L
        if L % t == 0:
            return t
    return t_max


def _pick_t_blk(B, T, H, W, E, N, dx, do, budget):
    """T-block for the fused path.  Each step streams (E, t_blk*H*W) and writes
    a (C, t_blk, kT, Ho, Wo) block.  Returns None if no legal block fits."""
    hw = H * W
    fixed = 2 * N * E * 2 + 2 * N * 4
    per_lane = 2 * E * dx + 2 * N * do + 3 * 4 * N  # x, out (double-buffered) + f32 scratch
    max_lanes = (budget - fixed) // max(per_lane, 1)
    if max_lanes < hw:
        return None
    t_max = min(T, max_lanes // hw)
    if B == 1 and T > 1:
        t_max = min(t_max, max(1, T // 2))          # >= 2 parallel steps for v7x's 2 TCs
    for t_blk in range(t_max, 0, -1):
        if T % t_blk:
            continue
        # x block lane dim must be a 128-multiple or the full T*H*W extent.
        if t_blk == T or (t_blk * hw) % 128 == 0:
            return t_blk
    return None


# ---------------------------------------------------------------------------
# Pallas kernels
# ---------------------------------------------------------------------------
def _matmul_bias_kernel(w_ref, b_ref, x_ref, o_ref):
    # w_ref: (N, E) resident, b_ref: (N, 1) f32 resident,
    # x_ref: (E, t_l) streamed, o_ref: (N, t_l).
    x = x_ref[...]
    if x.dtype != w_ref.dtype:
        x = x.astype(w_ref.dtype)          # in-VMEM cast; HBM stream stays at input dtype
    acc = jnp.dot(w_ref[...], x, preferred_element_type=jnp.float32)
    o_ref[...] = (acc + b_ref[...]).astype(o_ref.dtype)


def _fused_unpatch_kernel(w_ref, b_ref, x_ref, o_ref, *, C, kT, kH, kW, t_blk, H, W):
    # Matmul + bias, then the patch scatter (pixel shuffle) on the VMEM tile so
    # the block written back is already in the final (C, t, kT, Ho, Wo) layout
    # -> no post-kernel HBM transpose pass.
    x = x_ref[...]
    if x.dtype != w_ref.dtype:
        x = x.astype(w_ref.dtype)
    acc = jnp.dot(w_ref[...], x, preferred_element_type=jnp.float32)   # (N, t_blk*H*W)
    acc = acc + b_ref[...]
    v = acc.reshape(C, kT, kH, kW, t_blk, H, W)
    v = jnp.transpose(v, (0, 4, 1, 5, 2, 6, 3))                        # (C, t, kT, H, kH, W, kW)
    o_ref[...] = v.reshape(C, t_blk, kT, H * kH, W * kW).astype(o_ref.dtype)


# ---------------------------------------------------------------------------
# Forward builders
# ---------------------------------------------------------------------------
def _make_two_pass_fn(x_shape, x_dtype, w_shape, stride, compute_dtype):
    """Previously-validated path: fused matmul+bias kernel, then an XLA
    reshape/transpose (or scatter-add for overlapping strides)."""
    B, E, T, H, W = x_shape
    _, C, kT, kH, kW = w_shape
    sT, sH, sW = stride
    To, Ho, Wo = (T - 1) * sT + kT, (H - 1) * sH + kH, (W - 1) * sW + kW
    N, kvol, L = C * kT * kH * kW, kT * kH * kW, T * H * W
    non_overlapping = (sT, sH, sW) == (kT, kH, kW)
    out_dtype = x_dtype if non_overlapping else jnp.float32

    dx = jnp.dtype(x_dtype).itemsize
    do = jnp.dtype(out_dtype).itemsize
    t_l = _pick_lane_tile(B, L, E, N, dx, do, _vmem_budget_bytes())

    call = pl.pallas_call(
        _matmul_bias_kernel,
        out_shape=jax.ShapeDtypeStruct((B, N, L), out_dtype),
        grid_spec=pltpu.PrefetchScalarGridSpec(
            num_scalar_prefetch=0,
            grid=(B, pl.cdiv(L, t_l)),
            in_specs=[
                pl.BlockSpec((N, E), lambda b, j: (0, 0)),   # VMEM-resident weight
                pl.BlockSpec((N, 1), lambda b, j: (0, 0)),   # VMEM-resident bias
                pl.BlockSpec((None, E, t_l), lambda b, j: (b, 0, j)),
            ],
            out_specs=pl.BlockSpec((None, N, t_l), lambda b, j: (b, 0, j)),
        ),
        compiler_params=pltpu.CompilerParams(
            dimension_semantics=("parallel", "parallel"),
            vmem_limit_bytes=_vmem_limit_bytes(),
        ),
    )

    def fn(x, weight, bias):
        w_t = weight.reshape(E, N).T.astype(compute_dtype)          # (N, E), rows (c,kt,kh,kw)
        if non_overlapping:
            b_col = jnp.repeat(bias.astype(jnp.float32), kvol).reshape(N, 1)
        else:
            b_col = jnp.zeros((N, 1), jnp.float32)
        x3 = x.reshape(B, E, L)
        # NOTE: if t_l does not divide L, Pallas masks the partial last block;
        # padded x columns feed garbage into the matmul but those output
        # columns are never written back (correct by construction).
        patches = call(w_t, b_col, x3)                               # (B, N, L)
        patches = patches.reshape(B, C, kT, kH, kW, T, H, W)
        if non_overlapping:
            out = jnp.transpose(patches, (0, 1, 5, 2, 6, 3, 7, 4))
            return out.reshape(B, C, To, Ho, Wo)
        # Overlapping strides: f32 scatter-add over kernel taps.
        # TODO(synk): if this path is ever hot, fold the k^3 scatter-add into a
        # Pallas kernel accumulating per output tile in VMEM (one HBM write).
        out = jnp.zeros((B, C, To, Ho, Wo), jnp.float32)
        for kt in range(kT):
            for kh in range(kH):
                for kw in range(kW):
                    out = out.at[
                        :, :,
                        kt: kt + (T - 1) * sT + 1: sT,
                        kh: kh + (H - 1) * sH + 1: sH,
                        kw: kw + (W - 1) * sW + 1: sW,
                    ].add(patches[:, :, kt, kh, kw])
        out = out + bias.astype(jnp.float32)[None, :, None, None, None]
        return out.astype(x_dtype)

    return jax.jit(fn)


def _make_fused_fn(x_shape, x_dtype, w_shape, compute_dtype):
    """Fused path (stride == patch): matmul + bias + in-VMEM patch scatter,
    writing the final layout directly (no second HBM pass)."""
    B, E, T, H, W = x_shape
    _, C, kT, kH, kW = w_shape
    N, kvol = C * kT * kH * kW, kT * kH * kW
    Ho, Wo, L = H * kH, W * kW, T * H * W
    out_dtype = x_dtype

    dx = jnp.dtype(x_dtype).itemsize
    do = jnp.dtype(out_dtype).itemsize
    t_blk = _pick_t_blk(B, T, H, W, E, N, dx, do, _vmem_budget_bytes())
    if t_blk is None:
        return None
    Lt = t_blk * H * W

    kernel = partial(_fused_unpatch_kernel, C=C, kT=kT, kH=kH, kW=kW,
                     t_blk=t_blk, H=H, W=W)
    call = pl.pallas_call(
        kernel,
        out_shape=jax.ShapeDtypeStruct((B, C, T, kT, Ho, Wo), out_dtype),
        grid_spec=pltpu.PrefetchScalarGridSpec(
            num_scalar_prefetch=0,
            grid=(B, T // t_blk),
            in_specs=[
                pl.BlockSpec((N, E), lambda b, t: (0, 0)),   # VMEM-resident weight
                pl.BlockSpec((N, 1), lambda b, t: (0, 0)),   # VMEM-resident bias
                pl.BlockSpec((None, E, Lt), lambda b, t: (b, 0, t)),
            ],
            out_specs=pl.BlockSpec((None, C, t_blk, kT, Ho, Wo),
                                   lambda b, t: (b, 0, t, 0, 0, 0)),
        ),
        compiler_params=pltpu.CompilerParams(
            dimension_semantics=("parallel", "parallel"),
            vmem_limit_bytes=_vmem_limit_bytes(),
        ),
    )

    def fn(x, weight, bias):
        w_t = weight.reshape(E, N).T.astype(compute_dtype)
        b_col = jnp.repeat(bias.astype(jnp.float32), kvol).reshape(N, 1)
        x3 = x.reshape(B, E, L)
        out6 = call(w_t, b_col, x3)                  # (B, C, T, kT, Ho, Wo)
        return out6.reshape(B, C, T * kT, Ho, Wo)    # free adjacent-dim merge

    return jax.jit(fn)


# ---------------------------------------------------------------------------
# Module
# ---------------------------------------------------------------------------
class UnPatchEmbed3d:
    """JAX/Pallas port of the PyTorch UnPatchEmbed3d (ConvTranspose3d) forward."""

    def __init__(self, patch_size, stride, channels, d_embed, bias=True, *, key,
                 compute_dtype=jnp.bfloat16):
        self.patch_size = tuple(patch_size)
        self.stride = tuple(stride)
        self.channels = channels
        self.d_embed = d_embed
        self.compute_dtype = compute_dtype
        kT, kH, kW = self.patch_size
        wkey, bkey = jax.random.split(key)
        fan_in = channels * kT * kH * kW
        bound = 1.0 / math.sqrt(fan_in)
        self.weight = jax.random.uniform(
            wkey, (d_embed, channels, kT, kH, kW), jnp.float32, -bound, bound)
        self.bias = (jax.random.uniform(bkey, (channels,), jnp.float32, -bound, bound)
                     if bias else None)
        self._plans = {}

    def forward(self, x, patch_size, stride):
        if tuple(patch_size) != self.patch_size:
            # TODO(synk): resize_patch_embed (trilinear-pinv kernel resampling) not implemented.
            raise NotImplementedError("dynamic patch-size resampling not supported")
        stride = tuple(stride)
        bias = self.bias if self.bias is not None else jnp.zeros((self.channels,), jnp.float32)
        sig = (x.shape, str(jnp.dtype(x.dtype)), stride)
        plan = self._plans.get(sig)
        if plan is None:
            plan = self._build_plan(x.shape, x.dtype, stride)
            self._plans[sig] = plan
        return plan(x, self.weight, bias)

    def _build_plan(self, x_shape, x_dtype, stride):
        w_shape = self.weight.shape
        safe_fn = _make_two_pass_fn(x_shape, x_dtype, w_shape, stride, self.compute_dtype)
        fused_fn = None
        if stride == self.patch_size:
            fused_fn = _make_fused_fn(x_shape, x_dtype, w_shape, self.compute_dtype)
        if fused_fn is None:
            return safe_fn

        state = {"decided": False, "use_fused": False}

        def plan(x, weight, bias):
            if state["decided"]:
                fn = fused_fn if state["use_fused"] else safe_fn
                return fn(x, weight, bias)
            # First call: compile & numerically verify the fused kernel against
            # the previously-validated two-pass path; fall back on any failure.
            ref = jax.block_until_ready(safe_fn(x, weight, bias))
            try:
                got = jax.block_until_ready(fused_fn(x, weight, bias))
                ok = np.allclose(np.asarray(got, np.float32),
                                 np.asarray(ref, np.float32), rtol=1e-3, atol=1e-3)
            except Exception:
                got, ok = None, False
            state["decided"] = True
            state["use_fused"] = bool(ok)
            return got if ok else ref

        return plan


# ---------------------------------------------------------------------------
# Reference (pure JAX/XLA) for verification
# ---------------------------------------------------------------------------
def _ref_conv_transpose3d(x, weight, bias, stride):
    kT, kH, kW = weight.shape[2:]
    w = jnp.flip(jnp.transpose(weight, (1, 0, 2, 3, 4)), axis=(2, 3, 4))  # (C, E, k...)
    out = jax.lax.conv_general_dilated(
        x, w,
        window_strides=(1, 1, 1),
        padding=[(kT - 1, kT - 1), (kH - 1, kH - 1), (kW - 1, kW - 1)],
        lhs_dilation=stride,
        dimension_numbers=("NCDHW", "OIDHW", "NCDHW"),
    )
    if bias is not None:
        out = out + bias[None, :, None, None, None]
    return out


if __name__ == "__main__":
    key = jax.random.PRNGKey(0)
    k_param, k_x = jax.random.split(key)

    # Small shapes consistent with the module.
    B, d_embed, channels = 2, 32, 4
    patch_size = (2, 4, 4)
    stride = (2, 4, 4)
    T, H, W = 4, 4, 4  # latent (token) grid

    mod = UnPatchEmbed3d(patch_size, stride, channels, d_embed, bias=True, key=k_param)
    x = jax.random.normal(k_x, (B, d_embed, T, H, W), jnp.float32)

    out = jax.block_until_ready(mod.forward(x, patch_size, stride))

    # Reference uses the same bf16-rounded operands the kernel feeds to the MXU
    # (accumulation is f32 in both), so the comparison isolates kernel bugs.
    x_r = x.astype(jnp.bfloat16).astype(jnp.float32)
    w_r = mod.weight.astype(jnp.bfloat16).astype(jnp.float32)
    ref = jax.block_until_ready(_ref_conv_transpose3d(x_r, w_r, mod.bias, stride))

    assert out.shape == (B, channels, (T - 1) * 2 + 2, (H - 1) * 4 + 4, (W - 1) * 4 + 4)
    np.testing.assert_allclose(np.asarray(out, np.float32), np.asarray(ref),
                               rtol=1e-2, atol=1e-2)
    print("KERNEL_OK")
</pallas_src>

<mosaic_0001>
module attributes {stable_mosaic.version = 11 : i64} {
  func.func @_matmul_bias_kernel(%arg0: i32, %arg1: i32, %arg2: memref<128x32xbf16, #tpu.memory_space<vmem>>, %arg3: memref<128x1xf32, #tpu.memory_space<vmem>>, %arg4: memref<1x32x64xf32, #tpu.memory_space<vmem>>, %arg5: memref<1x128x64xf32, #tpu.memory_space<vmem>>) attributes {dimension_semantics = [#tpu.dimension_semantics<parallel>, #tpu.dimension_semantics<parallel>], iteration_bounds = array<i64: 2, 1>, scalar_prefetch = 0 : i64, scratch_operands = 0 : i64, tpu.core_type = #tpu.core_type<tc>, window_params = [{pipeline_mode = #tpu.pipeline_mode<synchronous>, transform_indices = @transform_0, window_bounds = array<i64: 128, 32>}, {pipeline_mode = #tpu.pipeline_mode<synchronous>, transform_indices = @transform_1, window_bounds = array<i64: 128, 1>}, {transform_indices = @transform_2, window_bounds = array<i64: 1, 32, 64>}, {transform_indices = @transform_3, window_bounds = array<i64: 1, 128, 64>}]} {
    %c0 = arith.constant 0 : index
    %c0_0 = arith.constant 0 : index
    %c0_1 = arith.constant 0 : index
    %0 = vector.load %arg4[%c0, %c0_0, %c0_1] : memref<1x32x64xf32, #tpu.memory_space<vmem>>, vector<1x32x64xf32>
    %1 = vector.shape_cast %0 : vector<1x32x64xf32> to vector<32x64xf32>
    %2 = arith.truncf %1 : vector<32x64xf32> to vector<32x64xbf16>
    %c0_2 = arith.constant 0 : index
    %c0_3 = arith.constant 0 : index
    %3 = vector.load %arg2[%c0_2, %c0_3] : memref<128x32xbf16, #tpu.memory_space<vmem>>, vector<128x32xbf16>
    %cst = arith.constant dense<0.000000e+00> : vector<128x64xf32>
    %4 = tpu.matmul %3, %2, %cst {dimension_numbers = #tpu.dot_dimension_numbers<[1], [0], [0], [1], [0, 0, 1, 1], [], []>} : vector<128x32xbf16>, vector<32x64xbf16>, vector<128x64xf32> -> vector<128x64xf32>
    %c0_4 = arith.constant 0 : index
    %c0_5 = arith.constant 0 : index
    %5 = vector.load %arg3[%c0_4, %c0_5] : memref<128x1xf32, #tpu.memory_space<vmem>>, vector<128x1xf32>
    %6 = vector.broadcast %5 : vector<128x1xf32> to vector<128x64xf32>
    %7 = arith.addf %4, %6 : vector<128x64xf32>
    %c0_6 = arith.constant 0 : index
    %c0_7 = arith.constant 0 : index
    %c0_8 = arith.constant 0 : index
    %8 = vector.load %arg5[%c0_6, %c0_7, %c0_8] : memref<1x128x64xf32, #tpu.memory_space<vmem>>, vector<1x128x64xf32>
    %9 = vector.shape_cast %8 : vector<1x128x64xf32> to vector<128x64xf32>
    %10 = vector.shape_cast %7 : vector<128x64xf32> to vector<1x128x64xf32>
    tpu.vector_store %arg5[%c0_6, %c0_7, %c0_8], %10 {strides = array<i32>} : memref<1x128x64xf32, #tpu.memory_space<vmem>>, vector<1x128x64xf32>,
    return
  }
  func.func @transform_0(%arg0: i32, %arg1: i32) -> (i32, i32) {
    %c0_i32 = arith.constant 0 : i32
    %c0_i32_0 = arith.constant 0 : i32
    %c0_i32_1 = arith.constant 0 : i32
    return %c0_i32, %c0_i32_0 : i32, i32
  }
  func.func @transform_1(%arg0: i32, %arg1: i32) -> (i32, i32) {
    %c0_i32 = arith.constant 0 : i32
    %c0_i32_0 = arith.constant 0 : i32
    %c0_i32_1 = arith.constant 0 : i32
    return %c0_i32, %c0_i32_0 : i32, i32
  }
  func.func @transform_2(%arg0: i32, %arg1: i32) -> (i32, i32, i32) {
    %c0_i32 = arith.constant 0 : i32
    %c0_i32_0 = arith.constant 0 : i32
    return %arg0, %c0_i32, %arg1 : i32, i32, i32
  }
  func.func @transform_3(%arg0: i32, %arg1: i32) -> (i32, i32, i32) {
    %c0_i32 = arith.constant 0 : i32
    %c0_i32_0 = arith.constant 0 : i32
    return %arg0, %c0_i32, %arg1 : i32, i32, i32
  }
}

</mosaic_0001>

<llo_original>
// kernel: fn.1
$region0: #{fn.1}
  #allocation0 [shape = 'u32[]', space=smem, size = 0x4, offset = 0x4, fixed_abs, tag = 'smem constant byte address 0x4 - core index']
  #allocation1 [shape = 'u32[144,128]{1,0:T(1,128)}', space=vmem, size = 0x12000, scoped, tag = 'internal scratch']
  %s0 = inlined_call_operand.vmem [shape: bf16[128,32], index: 0, kind: input, shape index: {}]
  %s1 = inlined_call_operand.vmem [shape: f32[128,1], index: 1, kind: input, shape index: {}]
  %s2 = inlined_call_operand.vmem [shape: f32[2,32,64], index: 2, kind: input, shape index: {}]
  %s3 = inlined_call_operand.vmem [shape: f32[2,128,64], index: 3, kind: output, shape index: {}]
  %s4 = sld [smem:[#allocation0]]
  $region45: #{fn.1} parent=0
    _
  %s6 = ssub.s32 1, %s4
  %s7 = scalar_select 0, %s6, %s4
  loop: start=0, step=1, limit=4
  $region2: #{fn.1} parent=0 // loop_pre_header
    _
  $region3: #{fn.1} parent=0 // loop_header
    %s9 = sphi 0, %s13
    %p10 = scmp.ge.s32.totalorder %s9, 4
    %s16 = sphi 0, %s28
    %s17 = sphi 0, %s24
    %s18 = sphi 0, %s16
    %s19 = sphi 0, %s17
    %s20 = sphi 0, %s18
    %s21 = sphi 0, %s19
    %s29 = sphi 0, %s29
    %s31 = sphi 0, %s29
    %s32 = sphi 0, %s31
    %s46 = sphi 0, %s32
    %s50 = sphi 0, %s50
    %s52 = sphi 0, %s50
    %s53 = sphi 0, %s52
    %s67 = sphi 0, %s53
    %s75 = sphi 0, %s77
    %s78 = sphi 0, %s75
    %s79 = sphi 0, %s78
    %s95 = sphi 0, %s79
    %s103 = sphi 0, %s105
    %s106 = sphi 0, %s103
    %s107 = sphi 0, %s106
    %s123 = sphi 0, %s107
  $region4: #{fn.1} parent=0 // loop_header_branch
    %12 = sbr.rel (%p10) target = $region8
  $region5: #{fn.1} parent=0 // loop_body
    %s14 = ssub.s32 %s9, 1
    %s15 = ssub.s32 %s9, 2
    %s22 = sadd.s32 1, %s17
    %p23 = scmp.ge.s32.totalorder %s22, 1
    %s24 = scalar_select %p23, 0, %s22
    %s25 = sadd.s32 1, %s16
    %s26 = scalar_select %p23, %s25, %s16
    %p27 = scmp.ge.s32.totalorder %s26, 2
    %s28 = scalar_select %p27, 0, %s26
    %s30 = sadd.s32 %s29, 1
    %p33 = scmp.eq.s32.totalorder %s9, 1
    %p34 = scmp.ne.s32.totalorder %s29, %s31
    %p35 = scmp.eq.s32.totalorder %s9, 0
    %p36 = por %p34, %p35
    %p37 = scmp.ne.s32.totalorder %s29, %s31
    %p38 = scmp.eq.s32.totalorder %s14, 1
    %p39 = por %p37, %p38
    %p40 = scmp.ne.s32.totalorder %s31, %s32
    %p41 = scmp.eq.s32.totalorder %s14, 0
    %p42 = por %p40, %p41
    %p43 = scmp.ne.s32.totalorder %s31, %s32
    %p44 = scmp.eq.s32.totalorder %s15, 1
    %p45 = por %p43, %p44
    %p47 = scmp.ne.s32.totalorder %s32, %s46
    %p48 = scmp.eq.s32.totalorder %s15, 0
    %p49 = por %p47, %p48
    %s51 = sadd.s32 %s50, 1
    %p54 = scmp.eq.s32.totalorder %s9, 1
    %p55 = scmp.ne.s32.totalorder %s50, %s52
    %p56 = scmp.eq.s32.totalorder %s9, 0
    %p57 = por %p55, %p56
    %p58 = scmp.ne.s32.totalorder %s50, %s52
    %p59 = scmp.eq.s32.totalorder %s14, 1
    %p60 = por %p58, %p59
    %p61 = scmp.ne.s32.totalorder %s52, %s53
    %p62 = scmp.eq.s32.totalorder %s14, 0
    %p63 = por %p61, %p62
    %p64 = scmp.ne.s32.totalorder %s52, %s53
    %p65 = scmp.eq.s32.totalorder %s15, 1
    %p66 = por %p64, %p65
    %p68 = scmp.ne.s32.totalorder %s53, %s67
    %p69 = scmp.eq.s32.totalorder %s15, 0
    %p70 = por %p68, %p69
    %s71 = ssub.s32 %s16, %s28
    %s72 = ssub.s32 %s17, %s24
    %s73 = sor.u32 %s71, %s72
    %p74 = scmp.eq.s32.totalorder %s73, 0
    %s76 = sadd.s32 %s75, 1
    %s77 = scalar_select %p74, %s75, %s76
    %p80 = pneg %p74
    %p81 = scmp.eq.s32.totalorder %s9, 1
    %p82 = por %p80, %p81
    %p83 = scmp.ne.s32.totalorder %s75, %s78
    %p84 = scmp.eq.s32.totalorder %s9, 0
    %p85 = por %p83, %p84
    %p86 = scmp.ne.s32.totalorder %s75, %s78
    %p87 = scmp.eq.s32.totalorder %s14, 1
    %p88 = por %p86, %p87
    %p89 = scmp.ne.s32.totalorder %s78, %s79
    %p90 = scmp.eq.s32.totalorder %s14, 0
    %p91 = por %p89, %p90
    %p92 = scmp.ne.s32.totalorder %s78, %s79
    %p93 = scmp.eq.s32.totalorder %s15, 1
    %p94 = por %p92, %p93
    %p96 = scmp.ne.s32.totalorder %s79, %s95
    %p97 = scmp.eq.s32.totalorder %s15, 0
    %p98 = por %p96, %p97
    %s99 = ssub.s32 %s16, %s28
    %s100 = ssub.s32 %s17, %s24
    %s101 = sor.u32 %s99, %s100
    %p102 = scmp.eq.s32.totalorder %s101, 0
    %s104 = sadd.s32 %s103, 1
    %s105 = scalar_select %p102, %s103, %s104
    %p108 = pneg %p102
    %p109 = scmp.eq.s32.totalorder %s9, 1
    %p110 = por %p108, %p109
    %p111 = scmp.ne.s32.totalorder %s103, %s106
    %p112 = scmp.eq.s32.totalorder %s9, 0
    %p113 = por %p111, %p112
    %p114 = scmp.ne.s32.totalorder %s103, %s106
    %p115 = scmp.eq.s32.totalorder %s14, 1
    %p116 = por %p114, %p115
    %p117 = scmp.ne.s32.totalorder %s106, %s107
    %p118 = scmp.eq.s32.totalorder %s14, 0
    %p119 = por %p117, %p118
    %p120 = scmp.ne.s32.totalorder %s106, %s107
    %p121 = scmp.eq.s32.totalorder %s15, 1
    %p122 = por %p120, %p121
    %p124 = scmp.ne.s32.totalorder %s107, %s123
    %p125 = scmp.eq.s32.totalorder %s15, 0
    %p126 = por %p124, %p125
    %p127 = scmp.le.s32.totalorder 1, %s9
    %p128 = scmp.lt.s32.totalorder %s9, 3
    %p129 = pnand %p127, %p128
    %p130 = pneg %p129
    // Predicated region
    $region9: #{fn.1} parent=5 // pred_check
      _
    $region10: #{fn.1} parent=5 // pred_check_branch
      %132 = sbr.rel (%p129) target = $region12
    $region11: #{fn.1} parent=5 // pred_region
      %s133 = ssub.s32 %s9, 1
      // Predicated region
      $region13: #{fn.1} parent=11 // pred_check
        %p134 = pneg %p42
      $region14: #{fn.1} parent=11 // pred_check_branch
        %136 = sbr.rel (%p134) target = $region16
      $region15: #{fn.1} parent=11 // pred_region
        _
      $region16: #{fn.1} parent=11 // pred_fallthru
        _
      // Predicated region
      $region17: #{fn.1} parent=11 // pred_check
        %p137 = pneg %p63
      $region18: #{fn.1} parent=11 // pred_check_branch
        %139 = sbr.rel (%p137) target = $region20
      $region19: #{fn.1} parent=11 // pred_region
        _
      $region20: #{fn.1} parent=11 // pred_fallthru
        _
    $region12: #{fn.1} parent=5 // pred_fallthru
      _
    %p140 = scmp.lt.s32.totalorder %s9, 2
    // Predicated region
    $region21: #{fn.1} parent=5 // pred_check
      %p141 = pneg %p140
    $region22: #{fn.1} parent=5 // pred_check_branch
      %143 = sbr.rel (%p141) target = $region24
    $region23: #{fn.1} parent=5 // pred_region
      // Predicated region
      $region25: #{fn.1} parent=23 // pred_check
        %p144 = pneg %p85
      $region26: #{fn.1} parent=23 // pred_check_branch
        %146 = sbr.rel (%p144) target = $region28
      $region27: #{fn.1} parent=23 // pred_region
        %p147 = scmp.lt.s32.totalorder %s16, 1
        %s148 = scalar_select %p147, %s16, 1
        %p149 = scmp.lt.s32.totalorder %s17, 0
        %s150 = scalar_select %p149, %s17, 0
        %s151 = smul.addr %s148, 4
        %s152 = sadd.s32 %s150, %s151
        %s153 = smul.addr %s152, 8
        %s154 = scalar_lea.vmem %s2, %s153
      $region28: #{fn.1} parent=23 // pred_fallthru
        _
    $region24: #{fn.1} parent=5 // pred_fallthru
      _
    %p155 = scmp.le.s32.totalorder 1, %s9
    %p156 = scmp.lt.s32.totalorder %s9, 3
    %p157 = pnand %p155, %p156
    %p158 = pneg %p157
    // Predicated region
    $region29: #{fn.1} parent=5 // pred_check
      _
    $region30: #{fn.1} parent=5 // pred_check_branch
      %160 = sbr.rel (%p157) target = $region32
    $region31: #{fn.1} parent=5 // pred_region
      %s161 = ssub.s32 %s9, 1
      %p162 = pneg %p42
      %p163 = pneg %p39
      %p164 = pneg %p63
      %p165 = pneg %p60
      %p166 = scmp.lt.s32.totalorder %s18, 1
      %s167 = scalar_select %p166, %s18, 1
      %p168 = scmp.lt.s32.totalorder %s19, 0
      %s169 = scalar_select %p168, %s19, 0
      %s170 = smul.addr %s167, 4
      %s171 = sadd.s32 %s169, %s170
      %s172 = smul.addr %s171, 8
      %s173 = scalar_lea.vmem %s2, %s172
      %p174 = pneg %p91
      %p175 = pneg %p88
      %p176 = pneg %p119
      %p177 = pneg %p116
      %p178 = scmp.lt.s32.totalorder %s18, 1
      %s179 = scalar_select %p178, %s18, 1
      %p180 = scmp.lt.s32.totalorder %s19, 0
      %s181 = scalar_select %p180, %s19, 0
      %s182 = smul.addr %s179, 16
      %s183 = sadd.s32 %s181, %s182
      %s184 = smul.addr %s183, 8
      %s185 = scalar_lea.vmem %s3, %s184
      %p186 = scmp.lt.s32.totalorder %s18, 1
      %s187 = scalar_select %p186, %s18, 1
      %p188 = scmp.lt.s32.totalorder %s19, 0
      %s189 = scalar_select %p188, %s19, 0
      %s190 = smul.addr %s187, 4
      %s191 = sadd.s32 %s189, %s190
      %s192 = smul.addr %s191, 8
      %s193 = scalar_lea.vmem %s2, %s192
      %p194 = scmp.lt.s32.totalorder %s18, 1
      %s195 = scalar_select %p194, %s18, 1
      %p196 = scmp.lt.s32.totalorder %s19, 0
      %s197 = scalar_select %p196, %s19, 0
      %s198 = smul.addr %s195, 16
      %s199 = sadd.s32 %s197, %s198
      %s200 = smul.addr %s199, 8
      %s201 = scalar_lea.vmem %s3, %s200
      %v203 = vld [vmem:[%s193] sm:$0xff]
      %v204 = vld [vmem:[%s193 + $0x8] sm:$0xff]
      %v205 = vld [vmem:[%s193 + $0x10] sm:$0xff]
      %v206 = vld [vmem:[%s193 + $0x18] sm:$0xff]
      %v207 = vpack.c.bf16 %v204, %v203
      %v208 = vpack.c.bf16 %v206, %v205
      %v209 = vld [vmem:[%s0] sm:$0xf]
      %v210 = vld [vmem:[%s0 + $0x4] sm:$0xf]
      %v211 = vld [vmem:[%s0 + $0x8] sm:$0xf]
      %v212 = vld [vmem:[%s0 + $0xc] sm:$0xf]
      %v213 = vld [vmem:[%s0 + $0x10] sm:$0xf]
      %v214 = vld [vmem:[%s0 + $0x14] sm:$0xf]
      %v215 = vld [vmem:[%s0 + $0x18] sm:$0xf]
      %v216 = vld [vmem:[%s0 + $0x1c] sm:$0xf]
      %v217 = vld [vmem:[%s0 + $0x20] sm:$0xf]
      %v218 = vld [vmem:[%s0 + $0x24] sm:$0xf]
      %v219 = vld [vmem:[%s0 + $0x28] sm:$0xf]
      %v220 = vld [vmem:[%s0 + $0x2c] sm:$0xf]
      %v221 = vld [vmem:[%s0 + $0x30] sm:$0xf]
      %v222 = vld [vmem:[%s0 + $0x34] sm:$0xf]
      %v223 = vld [vmem:[%s0 + $0x38] sm:$0xf]
      %v224 = vld [vmem:[%s0 + $0x3c] sm:$0xf]
      %v225 = vld [vmem:[%s1] sm:$0xff]
      %v226 = vld [vmem:[%s1 + $0x8] sm:$0xff]
      %v227 = vld [vmem:[%s1 + $0x10] sm:$0xff]
      %v228 = vld [vmem:[%s1 + $0x18] sm:$0xff]
      %v229 = vld [vmem:[%s1 + $0x20] sm:$0xff]
      %v230 = vld [vmem:[%s1 + $0x28] sm:$0xff]
      %v231 = vld [vmem:[%s1 + $0x30] sm:$0xff]
      %v232 = vld [vmem:[%s1 + $0x38] sm:$0xff]
      %v233 = vld [vmem:[%s1 + $0x40] sm:$0xff]
      %v234 = vld [vmem:[%s1 + $0x48] sm:$0xff]
      %v235 = vld [vmem:[%s1 + $0x50] sm:$0xff]
      %v236 = vld [vmem:[%s1 + $0x58] sm:$0xff]
      %v237 = vld [vmem:[%s1 + $0x60] sm:$0xff]
      %v238 = vld [vmem:[%s1 + $0x68] sm:$0xff]
      %v239 = vld [vmem:[%s1 + $0x70] sm:$0xff]
      %v240 = vld [vmem:[%s1 + $0x78] sm:$0xff]
      %242 = vset.pattern.permute.xlu0 0
      %243 = vperm.xlu0 %242, %v225
      %v244 = vpop.permute.xlu0 %243
      %247 = vset.pattern.permute.xlu0 0
      %248 = vperm.xlu0 %247, %v226
      %v249 = vpop.permute.xlu0 %248
      %252 = vset.pattern.permute.xlu0 0
      %253 = vperm.xlu0 %252, %v227
      %v254 = vpop.permute.xlu0 %253
      %257 = vset.pattern.permute.xlu0 0
      %258 = vperm.xlu0 %257, %v228
      %v259 = vpop.permute.xlu0 %258
      %262 = vset.pattern.permute.xlu0 0
      %263 = vperm.xlu0 %262, %v229
      %v264 = vpop.permute.xlu0 %263
      %267 = vset.pattern.permute.xlu0 0
      %268 = vperm.xlu0 %267, %v230
      %v269 = vpop.permute.xlu0 %268
      %272 = vset.pattern.permute.xlu0 0
      %273 = vperm.xlu0 %272, %v231
      %v274 = vpop.permute.xlu0 %273
      %277 = vset.pattern.permute.xlu0 0
      %278 = vperm.xlu0 %277, %v232
      %v279 = vpop.permute.xlu0 %278
      %282 = vset.pattern.permute.xlu0 0
      %283 = vperm.xlu0 %282, %v233
      %v284 = vpop.permute.xlu0 %283
      %287 = vset.pattern.permute.xlu0 0
      %288 = vperm.xlu0 %287, %v234
      %v289 = vpop.permute.xlu0 %288
      %292 = vset.pattern.permute.xlu0 0
      %293 = vperm.xlu0 %292, %v235
      %v294 = vpop.permute.xlu0 %293
      %297 = vset.pattern.permute.xlu0 0
      %298 = vperm.xlu0 %297, %v236
      %v299 = vpop.permute.xlu0 %298
      %302 = vset.pattern.permute.xlu0 0
      %303 = vperm.xlu0 %302, %v237
      %v304 = vpop.permute.xlu0 %303
      %307 = vset.pattern.permute.xlu0 0
      %308 = vperm.xlu0 %307, %v238
      %v309 = vpop.permute.xlu0 %308
      %312 = vset.pattern.permute.xlu0 0
      %313 = vperm.xlu0 %312, %v239
      %v314 = vpop.permute.xlu0 %313
      %317 = vset.pattern.permute.xlu0 0
      %318 = vperm.xlu0 %317, %v240
      %v319 = vpop.permute.xlu0 %318
      %v337 = vunpack.c.l.b16 %v209
      %v338 = vunpack.c.l.b16 %v210
      %v339 = vunpack.c.l.b16 %v211
      %v340 = vunpack.c.l.b16 %v212
      %v341 = vunpack.c.l.b16 %v213
      %v342 = vunpack.c.l.b16 %v214
      %v343 = vunpack.c.l.b16 %v215
      %v344 = vunpack.c.l.b16 %v216
      %v345 = vunpack.c.l.b16 %v217
      %v346 = vunpack.c.l.b16 %v218
      %v347 = vunpack.c.l.b16 %v219
      %v348 = vunpack.c.l.b16 %v220
      %v349 = vunpack.c.l.b16 %v221
      %v350 = vunpack.c.l.b16 %v222
      %v351 = vunpack.c.l.b16 %v223
      %v352 = vunpack.c.l.b16 %v224
      %v353 = vpack.c.b16 %v338, %v337
      %v354 = vpack.c.b16 %v340, %v339
      %v355 = vpack.c.b16 %v342, %v341
      %v356 = vpack.c.b16 %v344, %v343
      %v357 = vpack.c.b16 %v346, %v345
      %v358 = vpack.c.b16 %v348, %v347
      %v359 = vpack.c.b16 %v350, %v349
      %v360 = vpack.c.b16 %v352, %v351
      %vm361 = vcmask 261120
      %v363 = vsel %vm361, %v353, 0
      %v366 = vsel %vm361, %v354, 0
      %v369 = vsel %vm361, %v355, 0
      %v372 = vsel %vm361, %v356, 0
      %v375 = vsel %vm361, %v357, 0
      %v378 = vsel %vm361, %v358, 0
      %v381 = vsel %vm361, %v359, 0
      %v384 = vsel %vm361, %v360, 0
      %386 = vmatprep.subr.bf16.mxu0 0
      %387 = vmatpush1.bf16.msra.mxu0 %v207
      %388 = vmatprep.subr.bf16.mxu0 0
      %389 = vmatpush1.bf16.msra.mxu0 %v208
      %390 = vmatprep.subr.bf16.mxu0 0
      %391 = vmatpush1.bf16.msra.mxu0 0
      %392 = vmatprep.subr.bf16.mxu0 0
      %393 = vmatpush1.bf16.msra.mxu0 0
      %394 = vmatprep.subr.bf16.mxu0 0
      %395 = vmatpush1.bf16.msra.mxu0 0
      %396 = vmatprep.subr.bf16.mxu0 0
      %397 = vmatpush1.bf16.msra.mxu0 0
      %398 = vmatprep.subr.bf16.mxu0 0
      %399 = vmatpush1.bf16.msra.mxu0 0
      %400 = vmatprep.subr.bf16.mxu0 0
      %401 = vmatpush1.bf16.msra.mxu0 0
      %402 = vmatprep.subr.bf16.mxu0 0
      %403 = vmatpush1.bf16.msra.mxu0 0
      %404 = vmatprep.subr.bf16.mxu0 0
      %405 = vmatpush1.bf16.msra.mxu0 0
      %406 = vmatprep.subr.bf16.mxu0 0
      %407 = vmatpush1.bf16.msra.mxu0 0
      %408 = vmatprep.subr.bf16.mxu0 0
      %409 = vmatpush1.bf16.msra.mxu0 0
      %410 = vmatprep.subr.bf16.mxu0 0
      %411 = vmatpush1.bf16.msra.mxu0 0
      %412 = vmatprep.subr.bf16.mxu0 0
      %413 = vmatpush1.bf16.msra.mxu0 0
      %414 = vmatprep.subr.bf16.mxu0 0
      %415 = vmatpush1.bf16.msra.mxu0 0
      %416 = vmatprep.subr.bf16.mxu0 0
      %417 = vmatpush1.bf16.msra.mxu0 0
      %418 = vmatprep.mubr.bf16.mxu0 0
      %419 = vmatmul.mubr.bf16.gmra.mrb[0].mxu0 %v363
      %v420 = vpop.f32.mrb[0].mxu0
      %v421 = vadd.f32 %v244, %v420
      %v422 = vpop.f32.mrb[0].mxu0
      %v423 = vpop.f32.mrb[0].mxu0
      %v424 = vadd.f32 %v249, %v423
      %v425 = vpop.f32.mrb[0].mxu0
      %426 = vmatprep.mubr.bf16.mxu0 0
      %427 = vmatmul.mubr.bf16.gmra.mrb[0].mxu0 %v366
      %v428 = vpop.f32.mrb[0].mxu0
      %v429 = vadd.f32 %v254, %v428
      %v430 = vpop.f32.mrb[0].mxu0
      %v431 = vpop.f32.mrb[0].mxu0
      %v432 = vadd.f32 %v259, %v431
      %v433 = vpop.f32.mrb[0].mxu0
      %434 = vmatprep.mubr.bf16.mxu0 0
      %435 = vmatmul.mubr.bf16.gmra.mrb[0].mxu0 %v369
      %v436 = vpop.f32.mrb[0].mxu0
      %v437 = vadd.f32 %v264, %v436
      %v438 = vpop.f32.mrb[0].mxu0
      %v439 = vpop.f32.mrb[0].mxu0
      %v440 = vadd.f32 %v269, %v439
      %v441 = vpop.f32.mrb[0].mxu0
      %442 = vmatprep.mubr.bf16.mxu0 0
      %443 = vmatmul.mubr.bf16.gmra.mrb[0].mxu0 %v372
      %v444 = vpop.f32.mrb[0].mxu0
      %v445 = vadd.f32 %v274, %v444
      %v446 = vpop.f32.mrb[0].mxu0
      %v447 = vpop.f32.mrb[0].mxu0
      %v448 = vadd.f32 %v279, %v447
      %v449 = vpop.f32.mrb[0].mxu0
      %450 = vmatprep.mubr.bf16.mxu0 0
      %451 = vmatmul.mubr.bf16.gmra.mrb[0].mxu0 %v375
      %v452 = vpop.f32.mrb[0].mxu0
      %v453 = vadd.f32 %v284, %v452
      %v454 = vpop.f32.mrb[0].mxu0
      %v455 = vpop.f32.mrb[0].mxu0
      %v456 = vadd.f32 %v289, %v455
      %v457 = vpop.f32.mrb[0].mxu0
      %458 = vmatprep.mubr.bf16.mxu0 0
      %459 = vmatmul.mubr.bf16.gmra.mrb[0].mxu0 %v378
      %v460 = vpop.f32.mrb[0].mxu0
      %v461 = vadd.f32 %v294, %v460
      %v462 = vpop.f32.mrb[0].mxu0
      %v463 = vpop.f32.mrb[0].mxu0
      %v464 = vadd.f32 %v299, %v463
      %v465 = vpop.f32.mrb[0].mxu0
      %466 = vmatprep.mubr.bf16.mxu0 0
      %467 = vmatmul.mubr.bf16.gmra.mrb[0].mxu0 %v381
      %v468 = vpop.f32.mrb[0].mxu0
      %v469 = vadd.f32 %v304, %v468
      %v470 = vpop.f32.mrb[0].mxu0
      %v471 = vpop.f32.mrb[0].mxu0
      %v472 = vadd.f32 %v309, %v471
      %v473 = vpop.f32.mrb[0].mxu0
      %474 = vmatprep.mubr.bf16.mxu0 0
      %475 = vmatmul.mubr.bf16.gmra.mrb[0].mxu0 %v384
      %v476 = vpop.f32.mrb[0].mxu0
      %v477 = vadd.f32 %v314, %v476
      %v478 = vpop.f32.mrb[0].mxu0
      %v479 = vpop.f32.mrb[0].mxu0
      %v480 = vadd.f32 %v319, %v479
      %v481 = vpop.f32.mrb[0].mxu0
      %482 = vdwg.mxu0
      %vm483 = vcmask 523264
      %484 = vst.msk [vmem:[%s201] sm:$0xff] %vm483, %v421
      %485 = vst.msk [vmem:[%s201 + $0x8] sm:$0xff] %vm483, %v424
      %486 = vst.msk [vmem:[%s201 + $0x10] sm:$0xff] %vm483, %v429
      %487 = vst.msk [vmem:[%s201 + $0x18] sm:$0xff] %vm483, %v432
      %488 = vst.msk [vmem:[%s201 + $0x20] sm:$0xff] %vm483, %v437
      %489 = vst.msk [vmem:[%s201 + $0x28] sm:$0xff] %vm483, %v440
      %490 = vst.msk [vmem:[%s201 + $0x30] sm:$0xff] %vm483, %v445
      %491 = vst.msk [vmem:[%s201 + $0x38] sm:$0xff] %vm483, %v448
      %492 = vst.msk [vmem:[%s201 + $0x40] sm:$0xff] %vm483, %v453
      %493 = vst.msk [vmem:[%s201 + $0x48] sm:$0xff] %vm483, %v456
      %494 = vst.msk [vmem:[%s201 + $0x50] sm:$0xff] %vm483, %v461
      %495 = vst.msk [vmem:[%s201 + $0x58] sm:$0xff] %vm483, %v464
      %496 = vst.msk [vmem:[%s201 + $0x60] sm:$0xff] %vm483, %v469
      %497 = vst.msk [vmem:[%s201 + $0x68] sm:$0xff] %vm483, %v472
      %498 = vst.msk [vmem:[%s201 + $0x70] sm:$0xff] %vm483, %v477
      %499 = vst.msk [vmem:[%s201 + $0x78] sm:$0xff] %vm483, %v480
      %p500 = scmp.lt.s32.totalorder %s18, 1
      %s501 = scalar_select %p500, %s18, 1
      %p502 = scmp.lt.s32.totalorder %s19, 0
      %s503 = scalar_select %p502, %s19, 0
      %s504 = smul.addr %s501, 16
      %s505 = sadd.s32 %s503, %s504
      %s506 = smul.addr %s505, 8
      %s507 = scalar_lea.vmem %s3, %s506
      // Predicated region
      $region33: #{fn.1} parent=31 // pred_check
        %p508 = pneg %p116
      $region34: #{fn.1} parent=31 // pred_check_branch
        %510 = sbr.rel (%p508) target = $region36
      $region35: #{fn.1} parent=31 // pred_region
        _
      $region36: #{fn.1} parent=31 // pred_fallthru
        _
    $region32: #{fn.1} parent=5 // pred_fallthru
      _
    %p511 = scmp.le.s32.totalorder 2, %s9
    // Predicated region
    $region37: #{fn.1} parent=5 // pred_check
      %p512 = pneg %p511
    $region38: #{fn.1} parent=5 // pred_check_branch
      %514 = sbr.rel (%p512) target = $region40
    $region39: #{fn.1} parent=5 // pred_region
      %s515 = ssub.s32 %s9, 2
      // Predicated region
      $region41: #{fn.1} parent=39 // pred_check
        %p516 = pneg %p122
      $region42: #{fn.1} parent=39 // pred_check_branch
        %518 = sbr.rel (%p516) target = $region44
      $region43: #{fn.1} parent=39 // pred_region
        %p519 = scmp.lt.s32.totalorder %s20, 1
        %s520 = scalar_select %p519, %s20, 1
        %p521 = scmp.lt.s32.totalorder %s21, 0
        %s522 = scalar_select %p521, %s21, 0
        %s523 = smul.addr %s520, 16
        %s524 = sadd.s32 %s522, %s523
        %s525 = smul.addr %s524, 8
        %s526 = scalar_lea.vmem %s3, %s525
      $region44: #{fn.1} parent=39 // pred_fallthru
        _
    $region40: #{fn.1} parent=5 // pred_fallthru
      _
  $region6: #{fn.1} parent=0 // loop_footer
    %s13 = sadd.s32 1, %s9
  $region7: #{fn.1} parent=0 // loop_footer_branch
    %8 = sbr.rel target = $region3
  $region8: #{fn.1} parent=0 // loop_exit
    _

</llo_original>
